<compile_context>
chip_gen: v5e
topology: v5e:2x2
jax: 0.10.0
libtpu: 0.0.40
codegen_flags: <defaults>
</compile_context>

<pallas_src>
import jax
import jax.numpy as jnp
from jax import lax
from jax.experimental import pallas as pl
from jax.experimental.pallas import tpu as pltpu


def _round_up(n, m):
    return ((n + m - 1) // m) * m


def simplenet_kernel(x_ref, w1_ref, b1_ref, w2_ref, b2_ref, w3_ref, b3_ref, oT_ref):
    """One batch tile of the fused 3-layer MLP.

    x_ref  : (TB, Fin)  input dtype (f32 or bf16), natural batch-major layout
    w*_ref : PyTorch-layout weights [out, in], bf16, VMEM-resident
    b*_ref : (out, 1) f32 column biases (broadcast across the batch lanes)
    oT_ref : (out_dim, TB) f32 -- batch on the lane axis (lane-dense stores)
    """
    # In-kernel cast: keeps the HBM input stream to a single pass (no separate
    # XLA cast/transpose pass over x in the wrapper).
    x = x_ref[...].astype(jnp.bfloat16)

    # Layer 1, computed transposed: contract Fin of w1 with Fin of x -> (64, TB).
    h1 = lax.dot_general(
        w1_ref[...], x, (((1,), (1,)), ((), ())),
        preferred_element_type=jnp.float32,
    )
    h1 = jnp.maximum(h1 + b1_ref[...], 0.0)

    # Layers 2/3: bf16 MXU inputs (single-pass MXU even on v5e's 128x128 MXU),
    # f32 accumulation, f32 bias/ReLU epilogues (friendly to v5e's f32-only VPU).
    h2 = jnp.dot(w2_ref[...], h1.astype(jnp.bfloat16),
                 preferred_element_type=jnp.float32)
    h2 = jnp.maximum(h2 + b2_ref[...], 0.0)

    yT = jnp.dot(w3_ref[...], h2.astype(jnp.bfloat16),
                 preferred_element_type=jnp.float32)
    oT_ref[...] = yT + b3_ref[...]


def _derive_batch_tile(B, Fin, out_dim, x_itemsize, block_b, vmem_budget_bytes):
    """Largest lane-aligned batch tile whose per-step VMEM footprint fits the
    budget (conservative: counts lane/sublane padding and double buffering)."""
    LANE, SUB = 128, 8
    fin_lanes = _round_up(max(Fin, 1), LANE)
    h1_rows, h2_rows = 64, 32
    per_b = (
        2 * fin_lanes * x_itemsize            # streamed x tile, double-buffered
        + 2 * _round_up(out_dim, SUB) * 4     # streamed out tile (f32), double-buffered
        + (h1_rows + h2_rows) * 4             # f32 intermediates h1, h2
        + (h1_rows + h2_rows) * 2             # bf16 MXU copies of h1, h2
    )
    # Resident weights/biases (bf16, padded, 2 buffers) -- generous upper bound.
    fixed = 2 * 2 * (h1_rows * fin_lanes + h2_rows * LANE
                     + _round_up(out_dim, 2 * SUB) * LANE + 4 * LANE)
    tb = max(LANE, ((vmem_budget_bytes - fixed) // per_b) // LANE * LANE)
    tb = min(tb, _round_up(block_b, LANE), _round_up(B, LANE))
    return int(tb)


def simplenet_forward(x, params, *, block_b=4096, transposed_output=False):
    """x: [B, in_shape] (f32 or bf16). params: PyTorch-layout w1,b1,w2,b2,w3,b3.

    Returns [B, out_dim] f32 logits (or the lane-dense (out_dim, B) slab if
    `transposed_output=True`, letting the consumer skip one relayout pass).
    """
    B, Fin = x.shape
    w1, b1 = params["w1"], params["b1"]
    w2, b2 = params["w2"], params["b2"]
    w3, b3 = params["w3"], params["b3"]
    out_dim = w3.shape[0]

    # Batch tile derived against a budget that is safe on every generation
    # (v7x: 64 MiB physical / 32 MiB default scoped; v5e/v6e: 128 MiB physical).
    VMEM_LIMIT = 32 << 20          # explicit scoped-VMEM limit we compile with
    VMEM_BUDGET = 24 << 20         # what we let the tile derivation use (headroom)
    TB = _derive_batch_tile(B, Fin, out_dim, jnp.dtype(x.dtype).itemsize,
                            block_b, VMEM_BUDGET)
    B_pad = _round_up(B, TB)

    # Only the batch dim is padded (no transpose, no dtype pass over x).
    xp = jnp.pad(x, ((0, B_pad - B), (0, 0))) if B_pad != B else x

    # Tiny weights: one-time cast to bf16 for the MXU; biases as f32 columns.
    w1c = w1.astype(jnp.bfloat16)
    w2c = w2.astype(jnp.bfloat16)
    w3c = w3.astype(jnp.bfloat16)
    b1c = b1.reshape(-1, 1).astype(jnp.float32)
    b2c = b2.reshape(-1, 1).astype(jnp.float32)
    b3c = b3.reshape(-1, 1).astype(jnp.float32)

    # Weights/biases stay resident in VMEM across all batch tiles.
    resident = lambda a: pl.BlockSpec(a.shape, lambda i: (0,) * a.ndim)

    outT = pl.pallas_call(
        simplenet_kernel,
        out_shape=jax.ShapeDtypeStruct((out_dim, B_pad), jnp.float32),
        grid=(B_pad // TB,),
        in_specs=[
            # Streamed, double-buffered; block spans the full feature width so
            # each DMA is one contiguous chunk of the natural [B, Fin] array.
            pl.BlockSpec((TB, Fin), lambda i: (i, 0)),
            resident(w1c), resident(b1c),
            resident(w2c), resident(b2c),
            resident(w3c), resident(b3c),
        ],
        # No logit-row padding: block sublane dim == full array dim (allowed),
        # batch stays on the 128-lane axis -> lane-dense stores.
        out_specs=pl.BlockSpec((out_dim, TB), lambda i: (0, i)),
        compiler_params=pltpu.CompilerParams(
            # Batch tiles are independent -> shard across v7x's 2 TensorCores
            # (no-op on v5e/v6e). pltpu.CORE_PARALLEL is the profile-gated
            # alternative if the second core sits idle.
            dimension_semantics=("parallel",),
            vmem_limit_bytes=VMEM_LIMIT,
        ),
    )(xp, w1c, b1c, w2c, b2c, w3c, b3c)

    if transposed_output:
        return outT[:, :B]              # (out_dim, B): consumer slices/relayouts
    return outT[:, :B].T                # [B, out_dim], PyTorch convention


def init_params(key, in_shape, out_shape):
    """PyTorch nn.Linear-style init: W,b ~ U(-1/sqrt(fan_in), 1/sqrt(fan_in)),
    W stored as [out, in], b as [out] (native PyTorch layout)."""
    dims = [(in_shape, 64), (64, 32), (32, out_shape)]
    params = {}
    keys = jax.random.split(key, 2 * len(dims))
    for i, (fi, fo) in enumerate(dims):
        bound = 1.0 / (float(fi) ** 0.5)
        params[f"w{i + 1}"] = jax.random.uniform(
            keys[2 * i], (fo, fi), jnp.float32, -bound, bound
        )
        params[f"b{i + 1}"] = jax.random.uniform(
            keys[2 * i + 1], (fo,), jnp.float32, -bound, bound
        )
    return params


if __name__ == "__main__":
    key = jax.random.PRNGKey(0)
    k_x, k_p = jax.random.split(key)

    B, in_shape, out_shape = 8, 16, 2  # small tabular-MLP shapes
    x = jax.random.normal(k_x, (B, in_shape), jnp.float32)
    params = init_params(k_p, in_shape, out_shape)

    out = simplenet_forward(x, params)
    out = jax.block_until_ready(out)
    assert out.shape == (B, out_shape)

    # Pure-JAX f32 reference with PyTorch forward semantics (y = x @ W^T + b).
    # The kernel feeds the MXU with bf16 operands (f32 accumulation), so compare
    # with bf16-level tolerance.
    ref = jnp.maximum(x @ params["w1"].T + params["b1"], 0.0)
    ref = jnp.maximum(ref @ params["w2"].T + params["b2"], 0.0)
    ref = ref @ params["w3"].T + params["b3"]
    assert jnp.allclose(out, ref, atol=2e-2, rtol=2e-2), "mismatch vs reference"

    print("KERNEL_OK")
</pallas_src>

<mosaic_0001>
module attributes {stable_mosaic.version = 11 : i64} {
  func.func @simplenet_kernel(%arg0: i32, %arg1: memref<128x16xf32, #tpu.memory_space<vmem>>, %arg2: memref<64x16xbf16, #tpu.memory_space<vmem>>, %arg3: memref<64x1xf32, #tpu.memory_space<vmem>>, %arg4: memref<32x64xbf16, #tpu.memory_space<vmem>>, %arg5: memref<32x1xf32, #tpu.memory_space<vmem>>, %arg6: memref<2x32xbf16, #tpu.memory_space<vmem>>, %arg7: memref<2x1xf32, #tpu.memory_space<vmem>>, %arg8: memref<2x128xf32, #tpu.memory_space<vmem>>) attributes {dimension_semantics = [#tpu.dimension_semantics<parallel>], iteration_bounds = array<i64: 1>, scalar_prefetch = 0 : i64, scratch_operands = 0 : i64, tpu.core_type = #tpu.core_type<tc>, window_params = [{transform_indices = @transform_0, window_bounds = array<i64: 128, 16>}, {pipeline_mode = #tpu.pipeline_mode<synchronous>, transform_indices = @transform_1, window_bounds = array<i64: 64, 16>}, {pipeline_mode = #tpu.pipeline_mode<synchronous>, transform_indices = @transform_2, window_bounds = array<i64: 64, 1>}, {pipeline_mode = #tpu.pipeline_mode<synchronous>, transform_indices = @transform_3, window_bounds = array<i64: 32, 64>}, {pipeline_mode = #tpu.pipeline_mode<synchronous>, transform_indices = @transform_4, window_bounds = array<i64: 32, 1>}, {pipeline_mode = #tpu.pipeline_mode<synchronous>, transform_indices = @transform_5, window_bounds = array<i64: 2, 32>}, {pipeline_mode = #tpu.pipeline_mode<synchronous>, transform_indices = @transform_6, window_bounds = array<i64: 2, 1>}, {transform_indices = @transform_7, window_bounds = array<i64: 2, 128>}]} {
    %c0 = arith.constant 0 : index
    %c0_0 = arith.constant 0 : index
    %0 = vector.load %arg1[%c0, %c0_0] : memref<128x16xf32, #tpu.memory_space<vmem>>, vector<128x16xf32>
    %1 = arith.truncf %0 : vector<128x16xf32> to vector<128x16xbf16>
    %c0_1 = arith.constant 0 : index
    %c0_2 = arith.constant 0 : index
    %2 = vector.load %arg2[%c0_1, %c0_2] : memref<64x16xbf16, #tpu.memory_space<vmem>>, vector<64x16xbf16>
    %cst = arith.constant dense<0.000000e+00> : vector<64x128xf32>
    %3 = tpu.matmul %2, %1, %cst {dimension_numbers = #tpu.dot_dimension_numbers<[1], [1], [0], [0], [0, 0, 1, 0], [], []>} : vector<64x16xbf16>, vector<128x16xbf16>, vector<64x128xf32> -> vector<64x128xf32>
    %c0_3 = arith.constant 0 : index
    %c0_4 = arith.constant 0 : index
    %4 = vector.load %arg3[%c0_3, %c0_4] : memref<64x1xf32, #tpu.memory_space<vmem>>, vector<64x1xf32>
    %5 = vector.broadcast %4 : vector<64x1xf32> to vector<64x128xf32>
    %6 = arith.addf %3, %5 : vector<64x128xf32>
    %cst_5 = arith.constant 0.000000e+00 : f32
    %7 = vector.broadcast %cst_5 : f32 to vector<64x128xf32>
    %8 = arith.maximumf %6, %7 : vector<64x128xf32>
    %c0_6 = arith.constant 0 : index
    %c0_7 = arith.constant 0 : index
    %9 = vector.load %arg4[%c0_6, %c0_7] : memref<32x64xbf16, #tpu.memory_space<vmem>>, vector<32x64xbf16>
    %10 = arith.truncf %8 : vector<64x128xf32> to vector<64x128xbf16>
    %cst_8 = arith.constant dense<0.000000e+00> : vector<32x128xf32>
    %11 = tpu.matmul %9, %10, %cst_8 {dimension_numbers = #tpu.dot_dimension_numbers<[1], [0], [0], [1], [0, 0, 1, 1], [], []>} : vector<32x64xbf16>, vector<64x128xbf16>, vector<32x128xf32> -> vector<32x128xf32>
    %c0_9 = arith.constant 0 : index
    %c0_10 = arith.constant 0 : index
    %12 = vector.load %arg5[%c0_9, %c0_10] : memref<32x1xf32, #tpu.memory_space<vmem>>, vector<32x1xf32>
    %13 = vector.broadcast %12 : vector<32x1xf32> to vector<32x128xf32>
    %14 = arith.addf %11, %13 : vector<32x128xf32>
    %cst_11 = arith.constant 0.000000e+00 : f32
    %15 = vector.broadcast %cst_11 : f32 to vector<32x128xf32>
    %16 = arith.maximumf %14, %15 : vector<32x128xf32>
    %c0_12 = arith.constant 0 : index
    %c0_13 = arith.constant 0 : index
    %17 = vector.load %arg6[%c0_12, %c0_13] : memref<2x32xbf16, #tpu.memory_space<vmem>>, vector<2x32xbf16>
    %18 = arith.truncf %16 : vector<32x128xf32> to vector<32x128xbf16>
    %cst_14 = arith.constant dense<0.000000e+00> : vector<2x128xf32>
    %19 = tpu.matmul %17, %18, %cst_14 {dimension_numbers = #tpu.dot_dimension_numbers<[1], [0], [0], [1], [0, 0, 1, 1], [], []>} : vector<2x32xbf16>, vector<32x128xbf16>, vector<2x128xf32> -> vector<2x128xf32>
    %c0_15 = arith.constant 0 : index
    %c0_16 = arith.constant 0 : index
    %20 = vector.load %arg7[%c0_15, %c0_16] : memref<2x1xf32, #tpu.memory_space<vmem>>, vector<2x1xf32>
    %21 = vector.broadcast %20 : vector<2x1xf32> to vector<2x128xf32>
    %22 = arith.addf %19, %21 : vector<2x128xf32>
    %c0_17 = arith.constant 0 : index
    %c0_18 = arith.constant 0 : index
    %23 = vector.load %arg8[%c0_17, %c0_18] : memref<2x128xf32, #tpu.memory_space<vmem>>, vector<2x128xf32>
    tpu.vector_store %arg8[%c0_17, %c0_18], %22 {strides = array<i32>} : memref<2x128xf32, #tpu.memory_space<vmem>>, vector<2x128xf32>,
    return
  }
  func.func @transform_0(%arg0: i32) -> (i32, i32) {
    %c0_i32 = arith.constant 0 : i32
    %c0_i32_0 = arith.constant 0 : i32
    return %arg0, %c0_i32 : i32, i32
  }
  func.func @transform_1(%arg0: i32) -> (i32, i32) {
    %c0_i32 = arith.constant 0 : i32
    %c0_i32_0 = arith.constant 0 : i32
    %c0_i32_1 = arith.constant 0 : i32
    return %c0_i32, %c0_i32_0 : i32, i32
  }
  func.func @transform_2(%arg0: i32) -> (i32, i32) {
    %c0_i32 = arith.constant 0 : i32
    %c0_i32_0 = arith.constant 0 : i32
    %c0_i32_1 = arith.constant 0 : i32
    return %c0_i32, %c0_i32_0 : i32, i32
  }
  func.func @transform_3(%arg0: i32) -> (i32, i32) {
    %c0_i32 = arith.constant 0 : i32
    %c0_i32_0 = arith.constant 0 : i32
    %c0_i32_1 = arith.constant 0 : i32
    return %c0_i32, %c0_i32_0 : i32, i32
  }
  func.func @transform_4(%arg0: i32) -> (i32, i32) {
    %c0_i32 = arith.constant 0 : i32
    %c0_i32_0 = arith.constant 0 : i32
    %c0_i32_1 = arith.constant 0 : i32
    return %c0_i32, %c0_i32_0 : i32, i32
  }
  func.func @transform_5(%arg0: i32) -> (i32, i32) {
    %c0_i32 = arith.constant 0 : i32
    %c0_i32_0 = arith.constant 0 : i32
    %c0_i32_1 = arith.constant 0 : i32
    return %c0_i32, %c0_i32_0 : i32, i32
  }
  func.func @transform_6(%arg0: i32) -> (i32, i32) {
    %c0_i32 = arith.constant 0 : i32
    %c0_i32_0 = arith.constant 0 : i32
    %c0_i32_1 = arith.constant 0 : i32
    return %c0_i32, %c0_i32_0 : i32, i32
  }
  func.func @transform_7(%arg0: i32) -> (i32, i32) {
    %c0_i32 = arith.constant 0 : i32
    %c0_i32_0 = arith.constant 0 : i32
    return %c0_i32, %arg0 : i32, i32
  }
}

</mosaic_0001>

<llo_original>
// kernel: tpu_custom_call.1
$region0: #{tpu_custom_call.1}
  #allocation0 [shape = 'u32[]', space=smem, size = 0x4, offset = 0x4, fixed_abs, tag = 'smem constant byte address 0x4 - core index']
  #allocation1 [shape = 'u32[72,128]{1,0:T(1,128)}', space=vmem, size = 0x9000, scoped, tag = 'internal scratch']
  %s0 = inlined_call_operand.vmem [shape: f32[128,16], index: 0, kind: input, shape index: {}]
  %s1 = inlined_call_operand.vmem [shape: bf16[64,16], index: 1, kind: input, shape index: {}]
  %s2 = inlined_call_operand.vmem [shape: f32[64,1], index: 2, kind: input, shape index: {}]
  %s3 = inlined_call_operand.vmem [shape: bf16[32,64], index: 3, kind: input, shape index: {}]
  %s4 = inlined_call_operand.vmem [shape: f32[32,1], index: 4, kind: input, shape index: {}]
  %s5 = inlined_call_operand.vmem [shape: bf16[2,32], index: 5, kind: input, shape index: {}]
  %s6 = inlined_call_operand.vmem [shape: f32[2,1], index: 6, kind: input, shape index: {}]
  %s7 = inlined_call_operand.hbm [shape: f32[2,128], index: 7, kind: output, shape index: {}]
  %s8 = sld [smem:[#allocation0]]
  $region38: #{tpu_custom_call.1} parent=0
    _
  %s10 = ssub.s32 1, %s8
  %s11 = scalar_select 0, %s10, %s8
  $region1: #{tpu_custom_call.1} parent=0
    #allocation2 [shape = 'u8[1024]{0}', space=vmem, size = 0x400, scoped, tag = 'output window, operand 0, single buffered']
    #allocation3 [shape = 's32[1]{0}', space=sflag, size = 0x4, scoped, tag = 'scoped memory for tpu_custom_call.1']
    %12 = vsyncpa [#allocation3], 0
    // Predicated region
    $region2: #{tpu_custom_call.1} parent=1 // pred_check
      _
    $region3: #{tpu_custom_call.1} parent=1 // pred_check_branch
      %14 = sbr.rel (0) target = $region5
    $region4: #{tpu_custom_call.1} parent=1 // pred_region
      _
    $region5: #{tpu_custom_call.1} parent=1 // pred_fallthru
      _
    // Predicated region
    $region6: #{tpu_custom_call.1} parent=1 // pred_check
      _
    $region7: #{tpu_custom_call.1} parent=1 // pred_check_branch
      %16 = sbr.rel (0) target = $region9
    $region8: #{tpu_custom_call.1} parent=1 // pred_region
      _
    $region9: #{tpu_custom_call.1} parent=1 // pred_fallthru
      _
    // Predicated region
    $region10: #{tpu_custom_call.1} parent=1 // pred_check
      _
    $region11: #{tpu_custom_call.1} parent=1 // pred_check_branch
      %18 = sbr.rel (0) target = $region13
    $region12: #{tpu_custom_call.1} parent=1 // pred_region
      _
    $region13: #{tpu_custom_call.1} parent=1 // pred_fallthru
      _
    // Predicated region
    $region14: #{tpu_custom_call.1} parent=1 // pred_check
      _
    $region15: #{tpu_custom_call.1} parent=1 // pred_check_branch
      %20 = sbr.rel (0) target = $region17
    $region16: #{tpu_custom_call.1} parent=1 // pred_region
      _
    $region17: #{tpu_custom_call.1} parent=1 // pred_fallthru
      _
    // Predicated region
    $region18: #{tpu_custom_call.1} parent=1 // pred_check
      _
    $region19: #{tpu_custom_call.1} parent=1 // pred_check_branch
      %22 = sbr.rel (0) target = $region21
    $region20: #{tpu_custom_call.1} parent=1 // pred_region
      _
    $region21: #{tpu_custom_call.1} parent=1 // pred_fallthru
      _
    // Predicated region
    $region22: #{tpu_custom_call.1} parent=1 // pred_check
      _
    $region23: #{tpu_custom_call.1} parent=1 // pred_check_branch
      %24 = sbr.rel (0) target = $region25
    $region24: #{tpu_custom_call.1} parent=1 // pred_region
      _
    $region25: #{tpu_custom_call.1} parent=1 // pred_fallthru
      _
    // Predicated region
    $region26: #{tpu_custom_call.1} parent=1 // pred_check
      _
    $region27: #{tpu_custom_call.1} parent=1 // pred_check_branch
      %26 = sbr.rel (0) target = $region29
    $region28: #{tpu_custom_call.1} parent=1 // pred_region
      _
    $region29: #{tpu_custom_call.1} parent=1 // pred_fallthru
      _
    %v28 = vld [vmem:[%s0] sm:$0xff]
    %v29 = vld [vmem:[%s0 + $0x8] sm:$0xff]
    %v30 = vld [vmem:[%s0 + $0x10] sm:$0xff]
    %v31 = vld [vmem:[%s0 + $0x18] sm:$0xff]
    %v32 = vld [vmem:[%s0 + $0x20] sm:$0xff]
    %v33 = vld [vmem:[%s0 + $0x28] sm:$0xff]
    %v34 = vld [vmem:[%s0 + $0x30] sm:$0xff]
    %v35 = vld [vmem:[%s0 + $0x38] sm:$0xff]
    %v36 = vld [vmem:[%s0 + $0x40] sm:$0xff]
    %v37 = vld [vmem:[%s0 + $0x48] sm:$0xff]
    %v38 = vld [vmem:[%s0 + $0x50] sm:$0xff]
    %v39 = vld [vmem:[%s0 + $0x58] sm:$0xff]
    %v40 = vld [vmem:[%s0 + $0x60] sm:$0xff]
    %v41 = vld [vmem:[%s0 + $0x68] sm:$0xff]
    %v42 = vld [vmem:[%s0 + $0x70] sm:$0xff]
    %v43 = vld [vmem:[%s0 + $0x78] sm:$0xff]
    %v44 = vpack.c.bf16 %v29, %v28
    %v45 = vpack.c.bf16 %v31, %v30
    %v46 = vpack.c.bf16 %v33, %v32
    %v47 = vpack.c.bf16 %v35, %v34
    %v48 = vpack.c.bf16 %v37, %v36
    %v49 = vpack.c.bf16 %v39, %v38
    %v50 = vpack.c.bf16 %v41, %v40
    %v51 = vpack.c.bf16 %v43, %v42
    %v52 = vld [vmem:[%s1] sm:$0xf]
    %v53 = vld [vmem:[%s1 + $0x4] sm:$0xf]
    %v54 = vld [vmem:[%s1 + $0x8] sm:$0xf]
    %v55 = vld [vmem:[%s1 + $0xc] sm:$0xf]
    %v56 = vld [vmem:[%s1 + $0x10] sm:$0xf]
    %v57 = vld [vmem:[%s1 + $0x14] sm:$0xf]
    %v58 = vld [vmem:[%s1 + $0x18] sm:$0xf]
    %v59 = vld [vmem:[%s1 + $0x1c] sm:$0xf]
    %v60 = vld [vmem:[%s2] sm:$0xff]
    %v61 = vld [vmem:[%s2 + $0x8] sm:$0xff]
    %v62 = vld [vmem:[%s2 + $0x10] sm:$0xff]
    %v63 = vld [vmem:[%s2 + $0x18] sm:$0xff]
    %v64 = vld [vmem:[%s2 + $0x20] sm:$0xff]
    %v65 = vld [vmem:[%s2 + $0x28] sm:$0xff]
    %v66 = vld [vmem:[%s2 + $0x30] sm:$0xff]
    %v67 = vld [vmem:[%s2 + $0x38] sm:$0xff]
    %69 = vset.pattern.permute.xlu0 0
    %70 = vperm.xlu0 %69, %v60
    %v71 = vpop.permute.xlu0 %70
    %74 = vset.pattern.permute.xlu0 0
    %75 = vperm.xlu0 %74, %v61
    %v76 = vpop.permute.xlu0 %75
    %79 = vset.pattern.permute.xlu0 0
    %80 = vperm.xlu0 %79, %v62
    %v81 = vpop.permute.xlu0 %80
    %84 = vset.pattern.permute.xlu0 0
    %85 = vperm.xlu0 %84, %v63
    %v86 = vpop.permute.xlu0 %85
    %89 = vset.pattern.permute.xlu0 0
    %90 = vperm.xlu0 %89, %v64
    %v91 = vpop.permute.xlu0 %90
    %94 = vset.pattern.permute.xlu0 0
    %95 = vperm.xlu0 %94, %v65
    %v96 = vpop.permute.xlu0 %95
    %99 = vset.pattern.permute.xlu0 0
    %100 = vperm.xlu0 %99, %v66
    %v101 = vpop.permute.xlu0 %100
    %104 = vset.pattern.permute.xlu0 0
    %105 = vperm.xlu0 %104, %v67
    %v106 = vpop.permute.xlu0 %105
    %v116 = vunpack.c.l.b16 %v52
    %v117 = vunpack.c.l.b16 %v53
    %v118 = vunpack.c.l.b16 %v54
    %v119 = vunpack.c.l.b16 %v55
    %v120 = vunpack.c.l.b16 %v56
    %v121 = vunpack.c.l.b16 %v57
    %v122 = vunpack.c.l.b16 %v58
    %v123 = vunpack.c.l.b16 %v59
    %v124 = vpack.c.b16 %v117, %v116
    %v125 = vpack.c.b16 %v119, %v118
    %v126 = vpack.c.b16 %v121, %v120
    %v127 = vpack.c.b16 %v123, %v122
    %vm128 = vcmask 130048
    %v130 = vsel %vm128, %v124, 0
    %v133 = vsel %vm128, %v125, 0
    %v136 = vsel %vm128, %v126, 0
    %v139 = vsel %vm128, %v127, 0
    %v142 = vsel %vm128, %v44, 0
    %v145 = vsel %vm128, %v45, 0
    %v148 = vsel %vm128, %v46, 0
    %v151 = vsel %vm128, %v47, 0
    %v154 = vsel %vm128, %v48, 0
    %v157 = vsel %vm128, %v49, 0
    %v160 = vsel %vm128, %v50, 0
    %v163 = vsel %vm128, %v51, 0
    %165 = vmatpush.bf16.xpose.msra.mxu0 %v163
    %166 = vmatpush.bf16.xpose.msra.mxu0 %v160
    %167 = vmatpush.bf16.xpose.msra.mxu0 %v157
    %168 = vmatpush.bf16.xpose.msra.mxu0 %v154
    %169 = vmatpush.bf16.xpose.msra.mxu0 %v151
    %170 = vmatpush.bf16.xpose.msra.mxu0 %v148
    %171 = vmatpush.bf16.xpose.msra.mxu0 %v145
    %172 = vmatpush.bf16.xpose.msra.mxu0 %v142
    %173 = vmatmul.bf16.gmra.mxu0 %v130
    %v174 = vpop.f32.mrf.mxu0
    %v175 = vadd.f32 %v71, %v174
    %v176 = vpop.f32.mrf.mxu0
    %v177 = vadd.f32 %v76, %v176
    %178 = vmatmul.bf16.gmra.mxu0 %v133
    %v179 = vpop.f32.mrf.mxu0
    %v180 = vadd.f32 %v81, %v179
    %v181 = vpop.f32.mrf.mxu0
    %v182 = vadd.f32 %v86, %v181
    %183 = vmatmul.bf16.gmra.mxu0 %v136
    %v184 = vpop.f32.mrf.mxu0
    %v185 = vadd.f32 %v91, %v184
    %v186 = vpop.f32.mrf.mxu0
    %v187 = vadd.f32 %v96, %v186
    %188 = vmatmul.bf16.gmra.mxu0 %v139
    %v189 = vpop.f32.mrf.mxu0
    %v190 = vadd.f32 %v101, %v189
    %v191 = vpop.f32.mrf.mxu0
    %v192 = vadd.f32 %v106, %v191
    %193 = vdwg.mxu0
    %v194 = vmax.f32 %v175, 0.0
    %v195 = vmax.f32 %v177, 0.0
    %v196 = vmax.f32 %v180, 0.0
    %v197 = vmax.f32 %v182, 0.0
    %v198 = vmax.f32 %v185, 0.0
    %v199 = vmax.f32 %v187, 0.0
    %v200 = vmax.f32 %v190, 0.0
    %v201 = vmax.f32 %v192, 0.0
    %v202 = vld [vmem:[%s3] sm:$0xf]
    %v203 = vld [vmem:[%s3 + $0x4] sm:$0xf]
    %v204 = vld [vmem:[%s3 + $0x8] sm:$0xf]
    %v205 = vld [vmem:[%s3 + $0xc] sm:$0xf]
    %v206 = vpack.c.bf16 %v195, %v194
    %v207 = vpack.c.bf16 %v197, %v196
    %v208 = vpack.c.bf16 %v199, %v198
    %v209 = vpack.c.bf16 %v201, %v200
    %v210 = vld [vmem:[%s4] sm:$0xff]
    %v211 = vld [vmem:[%s4 + $0x8] sm:$0xff]
    %v212 = vld [vmem:[%s4 + $0x10] sm:$0xff]
    %v213 = vld [vmem:[%s4 + $0x18] sm:$0xff]
    %215 = vset.pattern.permute.xlu0 0
    %216 = vperm.xlu0 %215, %v210
    %v217 = vpop.permute.xlu0 %216
    %220 = vset.pattern.permute.xlu0 0
    %221 = vperm.xlu0 %220, %v211
    %v222 = vpop.permute.xlu0 %221
    %225 = vset.pattern.permute.xlu0 0
    %226 = vperm.xlu0 %225, %v212
    %v227 = vpop.permute.xlu0 %226
    %230 = vset.pattern.permute.xlu0 0
    %231 = vperm.xlu0 %230, %v213
    %v232 = vpop.permute.xlu0 %231
    %v238 = vunpack.c.l.b16 %v202
    %v239 = vunpack.c.l.b16 %v203
    %v240 = vunpack.c.l.b16 %v204
    %v241 = vunpack.c.l.b16 %v205
    %v242 = vpack.c.b16 %v239, %v238
    %v243 = vpack.c.b16 %v241, %v240
    %vm244 = vcmask 523264
    %v246 = vsel %vm244, %v242, 0
    %v249 = vsel %vm244, %v243, 0
    %251 = vmatpush.bf16.msra.mxu0 0
    %252 = vmatpush.bf16.msra.mxu0 0
    %253 = vmatpush.bf16.msra.mxu0 0
    %254 = vmatpush.bf16.msra.mxu0 0
    %255 = vmatpush.bf16.msra.mxu0 %v209
    %256 = vmatpush.bf16.msra.mxu0 %v208
    %257 = vmatpush.bf16.msra.mxu0 %v207
    %258 = vmatpush.bf16.msra.mxu0 %v206
    %259 = vmatmul.bf16.gmra.mxu0 %v246
    %v260 = vpop.f32.mrf.mxu0
    %v261 = vadd.f32 %v217, %v260
    %v262 = vpop.f32.mrf.mxu0
    %v263 = vadd.f32 %v222, %v262
    %264 = vmatmul.bf16.gmra.mxu0 %v249
    %v265 = vpop.f32.mrf.mxu0
    %v266 = vadd.f32 %v227, %v265
    %v267 = vpop.f32.mrf.mxu0
    %v268 = vadd.f32 %v232, %v267
    %269 = vdwg.mxu0
    %v270 = vmax.f32 %v261, 0.0
    %v271 = vmax.f32 %v263, 0.0
    %v272 = vmax.f32 %v266, 0.0
    %v273 = vmax.f32 %v268, 0.0
    %v274 = vld [vmem:[%s5] sm:$0x1]
    %v275 = vpack.c.bf16 %v271, %v270
    %v276 = vpack.c.bf16 %v273, %v272
    %v277 = vld [vmem:[%s6] sm:$0x3]
    %279 = vset.pattern.permute.xlu0 0
    %280 = vperm.xlu0 %279, %v277
    %v281 = vpop.permute.xlu0 %280
    %vm283 = vcmask 261120
    %v285 = vsel %vm283, %v274, 0
    %287 = vmatpush.bf16.msra.mxu0 0
    %288 = vmatpush.bf16.msra.mxu0 0
    %289 = vmatpush.bf16.msra.mxu0 0
    %290 = vmatpush.bf16.msra.mxu0 0
    %291 = vmatpush.bf16.msra.mxu0 0
    %292 = vmatpush.bf16.msra.mxu0 0
    %293 = vmatpush.bf16.msra.mxu0 %v276
    %294 = vmatpush.bf16.msra.mxu0 %v275
    %295 = vmatmul.bf16.gmra.mxu0 %v285
    %v296 = vpop.f32.mrf.mxu0
    %v297 = vadd.f32 %v281, %v296
    %v298 = vpop.f32.mrf.mxu0
    %299 = vdwg.mxu0
    %300 = vst [vmem:[#allocation2] sm:$0x3] %v297
    // Predicated region
    $region30: #{tpu_custom_call.1} parent=1 // pred_check
      _
    $region31: #{tpu_custom_call.1} parent=1 // pred_check_branch
      %302 = sbr.rel (0) target = $region33
    $region32: #{tpu_custom_call.1} parent=1 // pred_region
      %304 = vsyncadd [#allocation3], 0
      %s306 = sshll.u32 [#allocation2], 4
      %s307 = int_to_ptr.vmem [resolvable:$true] %s306
      %s308 = sshll.u32 %s7, 4
      %s309 = int_to_ptr.hbm [resolvable:$true] %s308
      %311 = dma.vmem_to_hbm [thread:$0]  %s307, 32, %s309, [#allocation3]
    $region33: #{tpu_custom_call.1} parent=1 // pred_fallthru
      _
    // Predicated region
    $region34: #{tpu_custom_call.1} parent=1 // pred_check
      _
    $region35: #{tpu_custom_call.1} parent=1 // pred_check_branch
      %313 = sbr.rel (0) target = $region37
    $region36: #{tpu_custom_call.1} parent=1 // pred_region
      %315 = dma.done [#allocation3], 32
    $region37: #{tpu_custom_call.1} parent=1 // pred_fallthru
      _
    %316 = vsyncpa [#allocation3], 1

</llo_original>
